<compile_context>
chip_gen: v5e
topology: v5e:2x2
jax: 0.10.0
libtpu: 0.0.40
codegen_flags: <defaults>
</compile_context>

<pallas_src>
import math

import jax
import jax.numpy as jnp
from jax import lax
from jax.experimental import pallas as pl
from jax.experimental.pallas import tpu as pltpu

_UNROLL = 8                 # tokens copied per fori_loop iteration (static unroll)
_TOKENS_PER_STEP = 512      # target tokens gathered per grid step


def _round_up(x, m):
    return ((x + m - 1) // m) * m


def _gather_kernel(idx_ref, tbl_ref, out_ref):
    """Exact row gather from a VMEM-resident table.

    idx_ref : (n_pad,) int32 in SMEM (scalar prefetch)
    tbl_ref : (V, D) table in VMEM, resident (constant index_map)
    out_ref : (T, D) output block for token group pl.program_id(0)
    """
    t = out_ref.shape[0]
    base = pl.program_id(0) * t

    def body(j, carry):
        row0 = pl.multiple_of(j * _UNROLL, _UNROLL)
        for u in range(_UNROLL):                      # static unroll
            tok = row0 + u
            row = idx_ref[base + tok]                 # scalar read from SMEM
            out_ref[pl.ds(tok, 1), :] = tbl_ref[pl.ds(row, 1), :]
        return carry

    lax.fori_loop(0, t // _UNROLL, body, 0)


def single_embedding2(pokemon_state, embedding_table,
                      tokens_per_step=_TOKENS_PER_STEP):
    """Pallas-backed equivalent of SingleEmbedding2.forward."""
    orig_shape = pokemon_state.shape
    v, d = embedding_table.shape
    n = int(math.prod(orig_shape)) if orig_shape else 1
    itemsize = jnp.dtype(embedding_table.dtype).itemsize

    # Small-table (VMEM-resident) regime; see TODO at top for the large-V path.
    table_bytes = v * d * itemsize
    assert table_bytes <= 16 * 1024 * 1024, "table too large for VMEM-resident gather"

    # Tokens per grid step: multiple of the unroll factor and of 8 (sublanes).
    t = max(_UNROLL, min(_round_up(tokens_per_step, _UNROLL), _round_up(n, _UNROLL)))
    t = _round_up(t, 8)
    n_pad = _round_up(n, t)
    n_groups = n_pad // t

    # Scalar-prefetch SMEM guard: a 1-D int32[n_pad] pads to next_pow2(4*n_pad) B.
    assert n_pad <= 128 * 1024, "index vector too large for SMEM scalar prefetch"

    # Indices -> SMEM scalar prefetch.  Clamp like jnp.take on TPU (valid
    # indices unaffected; nn.Embedding would raise on OOB instead).
    idx = pokemon_state.reshape(-1).astype(jnp.int32)
    idx = jnp.clip(idx, 0, v - 1)
    if n_pad != n:
        idx = jnp.concatenate([idx, jnp.zeros((n_pad - n,), dtype=jnp.int32)])

    # Explicit VMEM budget: resident table + double-buffered output blocks
    # + slack.  Stays well under every generation's limit (incl. v7x 64 MiB).
    vmem_budget = int(table_bytes + 3 * t * d * itemsize + (2 << 20))
    vmem_budget = max(vmem_budget, 16 * 1024 * 1024)

    out = pl.pallas_call(
        _gather_kernel,
        out_shape=jax.ShapeDtypeStruct((n_pad, d), embedding_table.dtype),
        grid_spec=pltpu.PrefetchScalarGridSpec(
            num_scalar_prefetch=1,
            grid=(n_groups,),
            # Resident table: constant block index -> fetched once, reused.
            in_specs=[pl.BlockSpec((v, d), lambda i, idx_ref: (0, 0))],
            out_specs=pl.BlockSpec((t, d), lambda i, idx_ref: (i, 0)),
        ),
        compiler_params=pltpu.CompilerParams(
            dimension_semantics=("parallel",),      # v7x: split groups over 2 TCs
            vmem_limit_bytes=vmem_budget,
        ),
        cost_estimate=pl.CostEstimate(
            flops=0, transcendentals=0,
            bytes_accessed=table_bytes + n_pad * 4 + n_pad * d * itemsize),
    )(idx, embedding_table)

    return out[:n].reshape(*orig_shape, d)


if __name__ == "__main__":
    # Small, deterministic setting consistent with the module's __init__.
    setting = {"dict_size": 64, "embed_dim": 32}
    batch, seq = 2, 8

    key = jax.random.PRNGKey(0)
    k_table, k_idx = jax.random.split(key)

    # nn.Embedding default init is N(0, 1).
    embedding_table = jax.random.normal(
        k_table, (setting["dict_size"], setting["embed_dim"]), dtype=jnp.float32
    )
    pokemon_state = jax.random.randint(
        k_idx, (batch, seq), 0, setting["dict_size"], dtype=jnp.int32
    )

    out = single_embedding2(pokemon_state, embedding_table)
    out = jax.block_until_ready(out)

    # Exact gather -> compare against plain-JAX reference.
    ref = jnp.take(embedding_table, pokemon_state, axis=0)
    assert out.shape == (batch, seq, setting["embed_dim"])
    assert jnp.allclose(out, ref, atol=1e-6, rtol=1e-6)

    print("KERNEL_OK")
</pallas_src>

<mosaic_0001>
module attributes {stable_mosaic.version = 11 : i64} {
  func.func @_gather_kernel(%arg0: i32, %arg1: memref<16xi32, #tpu.memory_space<smem>>, %arg2: memref<64x32xf32, #tpu.memory_space<vmem>>, %arg3: memref<16x32xf32, #tpu.memory_space<vmem>>) attributes {dimension_semantics = [#tpu.dimension_semantics<parallel>], iteration_bounds = array<i64: 1>, scalar_prefetch = 1 : i64, scratch_operands = 0 : i64, tpu.core_type = #tpu.core_type<tc>, window_params = [{pipeline_mode = #tpu.pipeline_mode<synchronous>, transform_indices = @transform_0, window_bounds = array<i64: 64, 32>}, {transform_indices = @transform_1, window_bounds = array<i64: 16, 32>}]} {
    %c16_i32 = arith.constant 16 : i32
    %0 = arith.muli %arg0, %c16_i32 : i32
    %c0_i32 = arith.constant 0 : i32
    %c2_i32 = arith.constant 2 : i32
    %1 = arith.addi %c0_i32, %c2_i32 : i32
    %c1_i32 = arith.constant 1 : i32
    scf.for %arg4 = %c0_i32 to %1 step %c1_i32  : i32 {
      %c8_i32 = arith.constant 8 : i32
      %2 = arith.muli %arg4, %c8_i32 : i32
      %3 = tpu.assume_multiple %2, 8 : i32
      %c0_i32_1 = arith.constant 0 : i32
      %4 = arith.addi %3, %c0_i32_1 : i32
      %5 = arith.addi %0, %4 : i32
      %6 = arith.index_cast %5 : i32 to index
      %7 = memref.load %arg1[%6] : memref<16xi32, #tpu.memory_space<smem>>
      %8 = arith.index_cast %7 : i32 to index
      %c0 = arith.constant 0 : index
      %9 = vector.load %arg2[%8, %c0] : memref<64x32xf32, #tpu.memory_space<vmem>>, vector<1x32xf32>
      %10 = arith.index_cast %4 : i32 to index
      %c0_2 = arith.constant 0 : index
      %11 = vector.load %arg3[%10, %c0_2] : memref<16x32xf32, #tpu.memory_space<vmem>>, vector<1x32xf32>
      tpu.vector_store %arg3[%10, %c0_2], %9 {strides = array<i32>} : memref<16x32xf32, #tpu.memory_space<vmem>>, vector<1x32xf32>,
      %c1_i32_3 = arith.constant 1 : i32
      %12 = arith.addi %3, %c1_i32_3 : i32
      %13 = arith.addi %0, %12 : i32
      %14 = arith.index_cast %13 : i32 to index
      %15 = memref.load %arg1[%14] : memref<16xi32, #tpu.memory_space<smem>>
      %16 = arith.index_cast %15 : i32 to index
      %c0_4 = arith.constant 0 : index
      %17 = vector.load %arg2[%16, %c0_4] : memref<64x32xf32, #tpu.memory_space<vmem>>, vector<1x32xf32>
      %18 = arith.index_cast %12 : i32 to index
      %c0_5 = arith.constant 0 : index
      %19 = vector.load %arg3[%18, %c0_5] : memref<16x32xf32, #tpu.memory_space<vmem>>, vector<1x32xf32>
      tpu.vector_store %arg3[%18, %c0_5], %17 {strides = array<i32>} : memref<16x32xf32, #tpu.memory_space<vmem>>, vector<1x32xf32>,
      %c2_i32_6 = arith.constant 2 : i32
      %20 = arith.addi %3, %c2_i32_6 : i32
      %21 = arith.addi %0, %20 : i32
      %22 = arith.index_cast %21 : i32 to index
      %23 = memref.load %arg1[%22] : memref<16xi32, #tpu.memory_space<smem>>
      %24 = arith.index_cast %23 : i32 to index
      %c0_7 = arith.constant 0 : index
      %25 = vector.load %arg2[%24, %c0_7] : memref<64x32xf32, #tpu.memory_space<vmem>>, vector<1x32xf32>
      %26 = arith.index_cast %20 : i32 to index
      %c0_8 = arith.constant 0 : index
      %27 = vector.load %arg3[%26, %c0_8] : memref<16x32xf32, #tpu.memory_space<vmem>>, vector<1x32xf32>
      tpu.vector_store %arg3[%26, %c0_8], %25 {strides = array<i32>} : memref<16x32xf32, #tpu.memory_space<vmem>>, vector<1x32xf32>,
      %c3_i32 = arith.constant 3 : i32
      %28 = arith.addi %3, %c3_i32 : i32
      %29 = arith.addi %0, %28 : i32
      %30 = arith.index_cast %29 : i32 to index
      %31 = memref.load %arg1[%30] : memref<16xi32, #tpu.memory_space<smem>>
      %32 = arith.index_cast %31 : i32 to index
      %c0_9 = arith.constant 0 : index
      %33 = vector.load %arg2[%32, %c0_9] : memref<64x32xf32, #tpu.memory_space<vmem>>, vector<1x32xf32>
      %34 = arith.index_cast %28 : i32 to index
      %c0_10 = arith.constant 0 : index
      %35 = vector.load %arg3[%34, %c0_10] : memref<16x32xf32, #tpu.memory_space<vmem>>, vector<1x32xf32>
      tpu.vector_store %arg3[%34, %c0_10], %33 {strides = array<i32>} : memref<16x32xf32, #tpu.memory_space<vmem>>, vector<1x32xf32>,
      %c4_i32 = arith.constant 4 : i32
      %36 = arith.addi %3, %c4_i32 : i32
      %37 = arith.addi %0, %36 : i32
      %38 = arith.index_cast %37 : i32 to index
      %39 = memref.load %arg1[%38] : memref<16xi32, #tpu.memory_space<smem>>
      %40 = arith.index_cast %39 : i32 to index
      %c0_11 = arith.constant 0 : index
      %41 = vector.load %arg2[%40, %c0_11] : memref<64x32xf32, #tpu.memory_space<vmem>>, vector<1x32xf32>
      %42 = arith.index_cast %36 : i32 to index
      %c0_12 = arith.constant 0 : index
      %43 = vector.load %arg3[%42, %c0_12] : memref<16x32xf32, #tpu.memory_space<vmem>>, vector<1x32xf32>
      tpu.vector_store %arg3[%42, %c0_12], %41 {strides = array<i32>} : memref<16x32xf32, #tpu.memory_space<vmem>>, vector<1x32xf32>,
      %c5_i32 = arith.constant 5 : i32
      %44 = arith.addi %3, %c5_i32 : i32
      %45 = arith.addi %0, %44 : i32
      %46 = arith.index_cast %45 : i32 to index
      %47 = memref.load %arg1[%46] : memref<16xi32, #tpu.memory_space<smem>>
      %48 = arith.index_cast %47 : i32 to index
      %c0_13 = arith.constant 0 : index
      %49 = vector.load %arg2[%48, %c0_13] : memref<64x32xf32, #tpu.memory_space<vmem>>, vector<1x32xf32>
      %50 = arith.index_cast %44 : i32 to index
      %c0_14 = arith.constant 0 : index
      %51 = vector.load %arg3[%50, %c0_14] : memref<16x32xf32, #tpu.memory_space<vmem>>, vector<1x32xf32>
      tpu.vector_store %arg3[%50, %c0_14], %49 {strides = array<i32>} : memref<16x32xf32, #tpu.memory_space<vmem>>, vector<1x32xf32>,
      %c6_i32 = arith.constant 6 : i32
      %52 = arith.addi %3, %c6_i32 : i32
      %53 = arith.addi %0, %52 : i32
      %54 = arith.index_cast %53 : i32 to index
      %55 = memref.load %arg1[%54] : memref<16xi32, #tpu.memory_space<smem>>
      %56 = arith.index_cast %55 : i32 to index
      %c0_15 = arith.constant 0 : index
      %57 = vector.load %arg2[%56, %c0_15] : memref<64x32xf32, #tpu.memory_space<vmem>>, vector<1x32xf32>
      %58 = arith.index_cast %52 : i32 to index
      %c0_16 = arith.constant 0 : index
      %59 = vector.load %arg3[%58, %c0_16] : memref<16x32xf32, #tpu.memory_space<vmem>>, vector<1x32xf32>
      tpu.vector_store %arg3[%58, %c0_16], %57 {strides = array<i32>} : memref<16x32xf32, #tpu.memory_space<vmem>>, vector<1x32xf32>,
      %c7_i32 = arith.constant 7 : i32
      %60 = arith.addi %3, %c7_i32 : i32
      %61 = arith.addi %0, %60 : i32
      %62 = arith.index_cast %61 : i32 to index
      %63 = memref.load %arg1[%62] : memref<16xi32, #tpu.memory_space<smem>>
      %64 = arith.index_cast %63 : i32 to index
      %c0_17 = arith.constant 0 : index
      %65 = vector.load %arg2[%64, %c0_17] : memref<64x32xf32, #tpu.memory_space<vmem>>, vector<1x32xf32>
      %66 = arith.index_cast %60 : i32 to index
      %c0_18 = arith.constant 0 : index
      %67 = vector.load %arg3[%66, %c0_18] : memref<16x32xf32, #tpu.memory_space<vmem>>, vector<1x32xf32>
      tpu.vector_store %arg3[%66, %c0_18], %65 {strides = array<i32>} : memref<16x32xf32, #tpu.memory_space<vmem>>, vector<1x32xf32>,
    }
    %c2_i32_0 = arith.constant 2 : i32
    return
  }
  func.func @transform_0(%arg0: i32, %arg1: memref<16xi32, #tpu.memory_space<smem>>) -> (i32, i32) {
    %c0_i32 = arith.constant 0 : i32
    %c0_i32_0 = arith.constant 0 : i32
    %c0_i32_1 = arith.constant 0 : i32
    return %c0_i32, %c0_i32_0 : i32, i32
  }
  func.func @transform_1(%arg0: i32, %arg1: memref<16xi32, #tpu.memory_space<smem>>) -> (i32, i32) {
    %c0_i32 = arith.constant 0 : i32
    %c0_i32_0 = arith.constant 0 : i32
    return %arg0, %c0_i32 : i32, i32
  }
}

</mosaic_0001>

<llo_original>
// kernel: tpu_custom_call.1
$region0: #{tpu_custom_call.1}
  #allocation0 [shape = 'u32[]', space=smem, size = 0x4, offset = 0x4, fixed_abs, tag = 'smem constant byte address 0x4 - core index']
  #allocation1 [shape = 'u32[72,128]{1,0:T(1,128)}', space=vmem, size = 0x9000, scoped, tag = 'internal scratch']
  #allocation2 [shape = 's32[1]{0}', space=sflag, size = 0x4, scoped, tag = 'scoped memory for tpu_custom_call.1']
  #allocation3 [shape = 'u8[512]{0}', space=smem, size = 0x200, scoped, tag = 'prefetched SMEM operand 0']
  %s0 = inlined_call_operand.vmem [shape: s32[16], index: 0, kind: input, shape index: {}]
  %s1 = inlined_call_operand.vmem [shape: f32[64,32], index: 1, kind: input, shape index: {}]
  %s2 = inlined_call_operand.hbm [shape: f32[16,32], index: 2, kind: output, shape index: {}]
  %s3 = sld [smem:[#allocation0]]
  $region21: #{tpu_custom_call.1} parent=0
    _
  %s5 = ssub.s32 1, %s3
  %s6 = scalar_select 0, %s5, %s3
  %s8 = sshll.u32 %s0, 4
  %s9 = int_to_ptr.vmem [resolvable:$true] %s8
  %11 = dma.vmem_to_smem %s9, 16, [#allocation3], [#allocation2]
  %13 = dma.done [#allocation2], 16
  %14 = sfence
  $region1: #{tpu_custom_call.1} parent=0
    #allocation4 [shape = 'u8[8192]{0}', space=vmem, size = 0x2000, scoped, tag = 'output window, operand 0, single buffered']
    #allocation5 [shape = 's32[1]{0}', space=sflag, size = 0x4, scoped, tag = 'scoped memory for tpu_custom_call.1']
    %15 = vsyncpa [#allocation5], 0
    // Predicated region
    $region2: #{tpu_custom_call.1} parent=1 // pred_check
      _
    $region3: #{tpu_custom_call.1} parent=1 // pred_check_branch
      %17 = sbr.rel (0) target = $region5
    $region4: #{tpu_custom_call.1} parent=1 // pred_region
      _
    $region5: #{tpu_custom_call.1} parent=1 // pred_fallthru
      _
    %s18 = smul.u32 0, 16
    loop: start=0, step=1, limit=2
    $region6: #{tpu_custom_call.1} parent=1 // loop_pre_header
      _
    $region7: #{tpu_custom_call.1} parent=1 // loop_header
      %s20 = sphi 0, %s24
      %p21 = scmp.ge.s32.totalorder %s20, 2
    $region8: #{tpu_custom_call.1} parent=1 // loop_header_branch
      %23 = sbr.rel (%p21) target = $region12
    $region9: #{tpu_custom_call.1} parent=1 // loop_body
      %s25 = smul.u32 %s20, 8
      %s26 = sadd.s32 %s18, %s25
      %s27 = sld [smem:[#allocation3 + %s26]]
      %s28 = scalar_lea.vmem %s1, %s27
      %v29 = vld [vmem:[%s28] sm:$0x1]
      %s30 = scalar_lea.vmem [#allocation4], %s25
      %vm31 = vcmask 253952
      %32 = vst.msk [vmem:[%s30] sm:$0x1] %vm31, %v29
      %s33 = sadd.s32 %s25, 1
      %s34 = sadd.s32 %s18, %s33
      %s35 = sld [smem:[#allocation3 + %s34]]
      %s36 = scalar_lea.vmem %s1, %s35
      %v37 = vld [vmem:[%s36] sm:$0x1]
      %s38 = scalar_lea.vmem [#allocation4], %s33
      %39 = vst.msk [vmem:[%s38] sm:$0x1] %vm31, %v37
      %s40 = sadd.s32 %s25, 2
      %s41 = sadd.s32 %s18, %s40
      %s42 = sld [smem:[#allocation3 + %s41]]
      %s43 = scalar_lea.vmem %s1, %s42
      %v44 = vld [vmem:[%s43] sm:$0x1]
      %s45 = scalar_lea.vmem [#allocation4], %s40
      %46 = vst.msk [vmem:[%s45] sm:$0x1] %vm31, %v44
      %s47 = sadd.s32 %s25, 3
      %s48 = sadd.s32 %s18, %s47
      %s49 = sld [smem:[#allocation3 + %s48]]
      %s50 = scalar_lea.vmem %s1, %s49
      %v51 = vld [vmem:[%s50] sm:$0x1]
      %s52 = scalar_lea.vmem [#allocation4], %s47
      %53 = vst.msk [vmem:[%s52] sm:$0x1] %vm31, %v51
      %s54 = sadd.s32 %s25, 4
      %s55 = sadd.s32 %s18, %s54
      %s56 = sld [smem:[#allocation3 + %s55]]
      %s57 = scalar_lea.vmem %s1, %s56
      %v58 = vld [vmem:[%s57] sm:$0x1]
      %s59 = scalar_lea.vmem [#allocation4], %s54
      %60 = vst.msk [vmem:[%s59] sm:$0x1] %vm31, %v58
      %s61 = sadd.s32 %s25, 5
      %s62 = sadd.s32 %s18, %s61
      %s63 = sld [smem:[#allocation3 + %s62]]
      %s64 = scalar_lea.vmem %s1, %s63
      %v65 = vld [vmem:[%s64] sm:$0x1]
      %s66 = scalar_lea.vmem [#allocation4], %s61
      %67 = vst.msk [vmem:[%s66] sm:$0x1] %vm31, %v65
      %s68 = sadd.s32 %s25, 6
      %s69 = sadd.s32 %s18, %s68
      %s70 = sld [smem:[#allocation3 + %s69]]
      %s71 = scalar_lea.vmem %s1, %s70
      %v72 = vld [vmem:[%s71] sm:$0x1]
      %s73 = scalar_lea.vmem [#allocation4], %s68
      %74 = vst.msk [vmem:[%s73] sm:$0x1] %vm31, %v72
      %s75 = sadd.s32 %s25, 7
      %s76 = sadd.s32 %s18, %s75
      %s77 = sld [smem:[#allocation3 + %s76]]
      %s78 = scalar_lea.vmem %s1, %s77
      %v79 = vld [vmem:[%s78] sm:$0x1]
      %s80 = scalar_lea.vmem [#allocation4], %s75
      %81 = vst.msk [vmem:[%s80] sm:$0x1] %vm31, %v79
    $region10: #{tpu_custom_call.1} parent=1 // loop_footer
      %s24 = sadd.s32 1, %s20
    $region11: #{tpu_custom_call.1} parent=1 // loop_footer_branch
      %19 = sbr.rel target = $region7
    $region12: #{tpu_custom_call.1} parent=1 // loop_exit
      _
    // Predicated region
    $region13: #{tpu_custom_call.1} parent=1 // pred_check
      _
    $region14: #{tpu_custom_call.1} parent=1 // pred_check_branch
      %83 = sbr.rel (0) target = $region16
    $region15: #{tpu_custom_call.1} parent=1 // pred_region
      %85 = vsyncadd [#allocation5], 0
      %s86 = sshll.u32 [#allocation4], 4
      %s87 = int_to_ptr.vmem [resolvable:$true] %s86
      %s88 = sshll.u32 %s2, 4
      %s89 = int_to_ptr.hbm [resolvable:$true] %s88
      %94 = dma.vmem_to_hbm [thread:$0]  %s87, 256, %s89, [#allocation5], 128, 128, 8
    $region16: #{tpu_custom_call.1} parent=1 // pred_fallthru
      _
    // Predicated region
    $region17: #{tpu_custom_call.1} parent=1 // pred_check
      _
    $region18: #{tpu_custom_call.1} parent=1 // pred_check_branch
      %96 = sbr.rel (0) target = $region20
    $region19: #{tpu_custom_call.1} parent=1 // pred_region
      %98 = dma.done [#allocation5], 256
    $region20: #{tpu_custom_call.1} parent=1 // pred_fallthru
      _
    %99 = vsyncpa [#allocation5], 1

</llo_original>
